<compile_context>
chip_gen: v7x
topology: tpu7x:2x2x1
jax: 0.10.0
libtpu: 0.0.40
codegen_flags: <defaults>
</compile_context>

<pallas_src>
import math

import jax
import jax.numpy as jnp
from jax.experimental import pallas as pl
from jax.experimental.pallas import tpu as pltpu

_LANE = 128      # lane width (last-dim granularity)
_SUBLANE = 8     # f32 sublane granularity


def _round_up(x, m):
    return ((x + m - 1) // m) * m


def _proj_gelu_kernel(x_ref, w_ref, b_ref, o_ref):
    """One grid step: o = gelu(x @ w + b) for one (key, m-tile, n-tile)."""
    # Native-dtype operands into the MXU, f32 accumulation.
    y = jnp.dot(x_ref[...], w_ref[...], preferred_element_type=jnp.float32)
    y = y + b_ref[...].astype(jnp.float32)          # (1, tn) broadcasts over rows
    # Exact erf-based GELU (torch.nn.GELU default).
    # TODO(synk): on v5e, jax.nn.gelu(approximate=True) offloads tanh to the EUP
    # if VALU-bound, at the cost of exact-GELU numerics.
    g = 0.5 * y * (1.0 + jax.lax.erf(y * (1.0 / math.sqrt(2.0))))
    o_ref[...] = g.astype(o_ref.dtype)


def stacked_linear_gelu(x_stk, w_stk, b_stk, *, tm=None, tn=None, out_dtype=None):
    """Fused per-key y = gelu(x @ w + b) over a stacked key axis.

    x_stk: (G, Mp, Kp)   zero-padded inputs, Mp % 8 == 0, Kp % 128 == 0
    w_stk: (G, Kp, Np)   zero-padded weights, Np % 128 == 0
    b_stk: (G, 1,  Np)   zero-padded biases (f32)
    Returns (G, Mp, Np).
    """
    G, Mp, Kp = x_stk.shape
    Gw, Kw, Np = w_stk.shape
    assert (G, Kp) == (Gw, Kw), ((G, Kp), (Gw, Kw))
    assert Mp % _SUBLANE == 0 and Kp % _LANE == 0 and Np % _LANE == 0

    if out_dtype is None:
        out_dtype = x_stk.dtype
    if tm is None:
        tm = 256 if Mp >= 256 else Mp          # Mp already a sublane multiple
    if tn is None:
        tn = 512 if Np >= 512 else Np          # lane-dense (>=128) output tiles
    assert Mp % tm == 0 and Np % tn == 0

    # Per-step VMEM working set (double-buffered), with headroom; cap for v7x.
    in_b = jnp.dtype(x_stk.dtype).itemsize
    w_b = jnp.dtype(w_stk.dtype).itemsize
    o_b = jnp.dtype(out_dtype).itemsize
    need = 2 * (tm * Kp * in_b + Kp * tn * w_b + tn * 4 + tm * tn * o_b)
    vmem_limit = int(min(max(need + (8 << 20), 32 << 20), 56 << 20))
    # TODO(synk): if Kp*tn weight tiles ever exceed this budget, add a K grid
    # axis ("arbitrary") with an f32 VMEM accumulator + pl.when init/finalize.

    grid = (G, Mp // tm, Np // tn)

    return pl.pallas_call(
        _proj_gelu_kernel,
        out_shape=jax.ShapeDtypeStruct((G, Mp, Np), out_dtype),
        grid_spec=pltpu.PrefetchScalarGridSpec(
            num_scalar_prefetch=0,
            grid=grid,
            in_specs=[
                pl.BlockSpec((None, tm, Kp), lambda g, i, j: (g, i, 0)),  # x slab
                pl.BlockSpec((None, Kp, tn), lambda g, i, j: (g, 0, j)),  # weight tile
                pl.BlockSpec((None, 1, tn), lambda g, i, j: (g, 0, j)),   # bias tile
            ],
            out_specs=pl.BlockSpec((None, tm, tn), lambda g, i, j: (g, i, j)),
        ),
        compiler_params=pltpu.CompilerParams(
            dimension_semantics=("parallel", "parallel", "parallel"),
            vmem_limit_bytes=vmem_limit,
        ),
    )(x_stk, w_stk, b_stk)


class FeatureProjectionLayerPallas:
    """JAX/Pallas port of omnisage FeatureProjectionLayer.

    Weights are pre-padded (K -> Kp, N -> Np, multiples of 128) and pre-stacked
    along a key axis at init; the forward pass packs all requested keys into one
    fused linear+GELU Pallas kernel and slices the padding off afterwards.
    """

    def __init__(self, dimensions_dict, output_dim, input_dim=None, key=None):
        if key is None:
            key = jax.random.PRNGKey(0)
        self._output_dim = output_dim
        names = sorted(dimensions_dict)
        self._key_index = {n: i for i, n in enumerate(names)}
        in_dims = {n: (input_dim if input_dim else dimensions_dict[n]) for n in names}
        self._kp = _round_up(max(in_dims.values()), _LANE)
        self._np = _round_up(output_dim, _LANE)

        self.params = {}           # unpadded (W, b) per key, for reference checks
        w_pad, b_pad = [], []
        for n in names:
            d = in_dims[n]
            key, kw, kb = jax.random.split(key, 3)
            bound = 1.0 / math.sqrt(d)
            w = jax.random.uniform(kw, (d, output_dim), jnp.float32,
                                   minval=-bound, maxval=bound)
            b = jax.random.uniform(kb, (output_dim,), jnp.float32,
                                   minval=-bound, maxval=bound)
            self.params[n] = (w, b)
            w_pad.append(jnp.pad(w, ((0, self._kp - d), (0, self._np - output_dim))))
            b_pad.append(jnp.pad(b, (0, self._np - output_dim)).reshape(1, self._np))
        self._w_stacked = jnp.stack(w_pad, axis=0)   # (G, Kp, Np)
        self._b_stacked = jnp.stack(b_pad, axis=0)   # (G, 1,  Np)

    def __call__(self, tensor_descriptions):
        names = list(tensor_descriptions.keys())
        idx = [self._key_index[n] for n in names]
        if idx == list(range(self._w_stacked.shape[0])):
            w_stk, b_stk = self._w_stacked, self._b_stacked
        else:
            gidx = jnp.asarray(idx, dtype=jnp.int32)
            w_stk = jnp.take(self._w_stacked, gidx, axis=0)
            b_stk = jnp.take(self._b_stacked, gidx, axis=0)

        m_sizes = {n: int(tensor_descriptions[n].shape[0]) for n in names}
        m_max = max(m_sizes.values())
        tm = 256 if m_max >= 256 else _round_up(m_max, _SUBLANE)
        mp = _round_up(m_max, tm)

        # Common compute dtype (bf16 inputs stay bf16 into the MXU).
        cdt = jnp.result_type(*[tensor_descriptions[n].dtype for n in names])

        xs = []
        for n in names:
            x = tensor_descriptions[n].astype(cdt)
            m, k = x.shape
            xs.append(jnp.pad(x, ((0, mp - m), (0, self._kp - k))))
        x_stk = jnp.stack(xs, axis=0)                               # (G, Mp, Kp)

        out_stk = stacked_linear_gelu(x_stk, w_stk.astype(cdt), b_stk,
                                      tm=tm, out_dtype=cdt)         # (G, Mp, Np)

        out = {}
        for g, n in enumerate(names):
            out[n] = out_stk[g, : m_sizes[n], : self._output_dim]
        return out


def _reference(tensor_descriptions, params):
    """Plain-JAX reference for verification (f32 math, exact erf GELU)."""
    out = {}
    for desc, x in tensor_descriptions.items():
        w, b = params[desc]
        y = x.astype(jnp.float32) @ w + b
        out[desc] = jax.nn.gelu(y, approximate=False).astype(x.dtype)
    return out


if __name__ == "__main__":
    # Small synthetic config: two feature types with different input dims.
    dimensions_dict = {"visual": 32, "text": 48}
    output_dim = 64
    batch = 8

    layer = FeatureProjectionLayerPallas(dimensions_dict, output_dim,
                                         key=jax.random.PRNGKey(0))

    key = jax.random.PRNGKey(0)
    k1, k2 = jax.random.split(key)
    inputs = {
        "visual": jax.random.normal(k1, (batch, dimensions_dict["visual"]), jnp.float32),
        "text": jax.random.normal(k2, (batch, dimensions_dict["text"]), jnp.float32),
    }

    outs = layer(inputs)
    outs = jax.tree_util.tree_map(jax.block_until_ready, outs)

    refs = _reference(inputs, layer.params)
    for name in inputs:
        assert outs[name].shape == (batch, output_dim), outs[name].shape
        err = float(jnp.max(jnp.abs(outs[name] - refs[name])))
        assert err < 1e-4, (name, err)

    print("KERNEL_OK")
</pallas_src>

<mosaic_0001>
module attributes {stable_mosaic.version = 11 : i64} {
  func.func @_proj_gelu_kernel(%arg0: i32, %arg1: i32, %arg2: i32, %arg3: memref<1x8x128xf32, #tpu.memory_space<vmem>>, %arg4: memref<1x128x128xf32, #tpu.memory_space<vmem>>, %arg5: memref<1x1x128xf32, #tpu.memory_space<vmem>>, %arg6: memref<1x8x128xf32, #tpu.memory_space<vmem>>) attributes {dimension_semantics = [#tpu.dimension_semantics<parallel>, #tpu.dimension_semantics<parallel>, #tpu.dimension_semantics<parallel>], iteration_bounds = array<i64: 2, 1, 1>, scalar_prefetch = 0 : i64, scratch_operands = 0 : i64, tpu.core_type = #tpu.core_type<tc>, window_params = [{transform_indices = @transform_0, window_bounds = array<i64: 1, 8, 128>}, {transform_indices = @transform_1, window_bounds = array<i64: 1, 128, 128>}, {transform_indices = @transform_2, window_bounds = array<i64: 1, 1, 128>}, {transform_indices = @transform_3, window_bounds = array<i64: 1, 8, 128>}]} {
    %c0 = arith.constant 0 : index
    %c0_0 = arith.constant 0 : index
    %c0_1 = arith.constant 0 : index
    %0 = vector.load %arg3[%c0, %c0_0, %c0_1] : memref<1x8x128xf32, #tpu.memory_space<vmem>>, vector<1x8x128xf32>
    %1 = vector.shape_cast %0 : vector<1x8x128xf32> to vector<8x128xf32>
    %c0_2 = arith.constant 0 : index
    %c0_3 = arith.constant 0 : index
    %c0_4 = arith.constant 0 : index
    %2 = vector.load %arg4[%c0_2, %c0_3, %c0_4] : memref<1x128x128xf32, #tpu.memory_space<vmem>>, vector<1x128x128xf32>
    %3 = vector.shape_cast %2 : vector<1x128x128xf32> to vector<128x128xf32>
    %cst = arith.constant dense<0.000000e+00> : vector<8x128xf32>
    %4 = tpu.matmul %1, %3, %cst {dimension_numbers = #tpu.dot_dimension_numbers<[1], [0], [0], [1], [0, 0, 1, 1], [], []>} : vector<8x128xf32>, vector<128x128xf32>, vector<8x128xf32> -> vector<8x128xf32>
    %c0_5 = arith.constant 0 : index
    %c0_6 = arith.constant 0 : index
    %c0_7 = arith.constant 0 : index
    %5 = vector.load %arg5[%c0_5, %c0_6, %c0_7] : memref<1x1x128xf32, #tpu.memory_space<vmem>>, vector<1x1x128xf32>
    %6 = vector.shape_cast %5 : vector<1x1x128xf32> to vector<1x128xf32>
    %7 = vector.broadcast %6 : vector<1x128xf32> to vector<8x128xf32>
    %8 = arith.addf %4, %7 : vector<8x128xf32>
    %cst_8 = arith.constant 5.000000e-01 : f32
    %9 = vector.broadcast %cst_8 : f32 to vector<8x128xf32>
    %10 = arith.mulf %9, %8 : vector<8x128xf32>
    %cst_9 = arith.constant 0.707106769 : f32
    %11 = vector.broadcast %cst_9 : f32 to vector<8x128xf32>
    %12 = arith.mulf %8, %11 : vector<8x128xf32>
    %13 = math.erf %12 : vector<8x128xf32>
    %cst_10 = arith.constant 1.000000e+00 : f32
    %14 = vector.broadcast %cst_10 : f32 to vector<8x128xf32>
    %15 = arith.addf %14, %13 : vector<8x128xf32>
    %16 = arith.mulf %10, %15 : vector<8x128xf32>
    %c0_11 = arith.constant 0 : index
    %c0_12 = arith.constant 0 : index
    %c0_13 = arith.constant 0 : index
    %17 = vector.load %arg6[%c0_11, %c0_12, %c0_13] : memref<1x8x128xf32, #tpu.memory_space<vmem>>, vector<1x8x128xf32>
    %18 = vector.shape_cast %17 : vector<1x8x128xf32> to vector<8x128xf32>
    %19 = vector.shape_cast %16 : vector<8x128xf32> to vector<1x8x128xf32>
    tpu.vector_store %arg6[%c0_11, %c0_12, %c0_13], %19 {strides = array<i32>} : memref<1x8x128xf32, #tpu.memory_space<vmem>>, vector<1x8x128xf32>,
    return
  }
  func.func @transform_0(%arg0: i32, %arg1: i32, %arg2: i32) -> (i32, i32, i32) {
    %c0_i32 = arith.constant 0 : i32
    %c0_i32_0 = arith.constant 0 : i32
    return %arg0, %arg1, %c0_i32 : i32, i32, i32
  }
  func.func @transform_1(%arg0: i32, %arg1: i32, %arg2: i32) -> (i32, i32, i32) {
    %c0_i32 = arith.constant 0 : i32
    %c0_i32_0 = arith.constant 0 : i32
    return %arg0, %c0_i32, %arg2 : i32, i32, i32
  }
  func.func @transform_2(%arg0: i32, %arg1: i32, %arg2: i32) -> (i32, i32, i32) {
    %c0_i32 = arith.constant 0 : i32
    %c0_i32_0 = arith.constant 0 : i32
    return %arg0, %c0_i32, %arg2 : i32, i32, i32
  }
  func.func @transform_3(%arg0: i32, %arg1: i32, %arg2: i32) -> (i32, i32, i32) {
    %c0_i32 = arith.constant 0 : i32
    return %arg0, %arg1, %arg2 : i32, i32, i32
  }
}

</mosaic_0001>

<llo_original>
// kernel: tpu_custom_call.1
$region0: #{tpu_custom_call.1}
  #allocation0 [shape = 'u32[]', space=smem, size = 0x4, offset = 0x4, fixed_abs, tag = 'smem constant byte address 0x4 - core index']
  #allocation1 [shape = 'u32[144,128]{1,0:T(1,128)}', space=vmem, size = 0x12000, scoped, tag = 'internal scratch']
  %s0 = inlined_call_operand.hbm [shape: f32[2,8,128], index: 0, kind: input, shape index: {}]
  %s1 = inlined_call_operand.hbm [shape: f32[2,128,128], index: 1, kind: input, shape index: {}]
  %s2 = inlined_call_operand.vmem [shape: f32[2,1,128], index: 2, kind: input, shape index: {}]
  %s3 = inlined_call_operand.hbm [shape: f32[2,8,128], index: 3, kind: output, shape index: {}]
  %s4 = sld [smem:[#allocation0]]
  $region53: #{tpu_custom_call.1} parent=0
    _
  %s6 = ssub.s32 1, %s4
  %s7 = scalar_select 0, %s6, %s4
  $region1: #{tpu_custom_call.1} parent=0
    #allocation2 [shape = 'u8[8192]{0}', space=vmem, size = 0x2000, scoped, tag = 'input window, operand 0']
    #allocation3 [shape = 's32[2]{0}', space=sflag, size = 0x8, scoped, tag = 'scoped memory for tpu_custom_call.1']
    #allocation4 [shape = 's32[2]{0}', space=sflag, size = 0x8, scoped, tag = 'scoped memory for tpu_custom_call.1']
    #allocation5 [shape = 'u8[131072]{0}', space=vmem, size = 0x20000, scoped, tag = 'input window, operand 1']
    #allocation6 [shape = 's32[2]{0}', space=sflag, size = 0x8, scoped, tag = 'scoped memory for tpu_custom_call.1']
    #allocation7 [shape = 'u8[8192]{0}', space=vmem, size = 0x2000, scoped, tag = 'output window, operand 0']
    %8 = vsyncpa [#allocation3], 0
    %s9 = scalar_lea.sflag [#allocation3], 1
    %10 = vsyncpa %s9, 0
    %11 = vsyncpa [#allocation6], 0
    %s12 = scalar_lea.sflag [#allocation6], 1
    %13 = vsyncpa %s12, 0
    %14 = vsyncpa [#allocation4], 0
    %s15 = scalar_lea.sflag [#allocation4], 1
    %16 = vsyncpa %s15, 0
    loop: start=0, step=1, limit=4
    $region2: #{tpu_custom_call.1} parent=1 // loop_pre_header
      _
    $region3: #{tpu_custom_call.1} parent=1 // loop_header
      %s18 = sphi 0, %s22
      %p19 = scmp.ge.s32.totalorder %s18, 4
      %s25 = sphi 0, %s44
      %s26 = sphi 0, %s40
      %s27 = sphi 0, %s36
      %s28 = sphi 0, %s25
      %s29 = sphi 0, %s26
      %s30 = sphi 0, %s27
      %s31 = sphi 0, %s28
      %s32 = sphi 0, %s29
      %s33 = sphi 0, %s30
      %s49 = sphi 0, %s51
      %s52 = sphi 0, %s49
      %s53 = sphi 0, %s52
      %s69 = sphi 0, %s53
      %s77 = sphi 0, %s79
      %s80 = sphi 0, %s77
      %s81 = sphi 0, %s80
      %s97 = sphi 0, %s81
      %s105 = sphi 0, %s107
      %s108 = sphi 0, %s105
      %s109 = sphi 0, %s108
      %s125 = sphi 0, %s109
      %s135 = sphi 0, %s137
      %s138 = sphi 0, %s135
      %s139 = sphi 0, %s138
      %s155 = sphi 0, %s139
    $region4: #{tpu_custom_call.1} parent=1 // loop_header_branch
      %21 = sbr.rel (%p19) target = $region8
    $region5: #{tpu_custom_call.1} parent=1 // loop_body
      %s23 = ssub.s32 %s18, 1
      %s24 = ssub.s32 %s18, 2
      %s34 = sadd.s32 1, %s27
      %p35 = scmp.ge.s32.totalorder %s34, 1
      %s36 = scalar_select %p35, 0, %s34
      %s37 = sadd.s32 1, %s26
      %s38 = scalar_select %p35, %s37, %s26
      %p39 = scmp.ge.s32.totalorder %s38, 1
      %s40 = scalar_select %p39, 0, %s38
      %s41 = sadd.s32 1, %s25
      %s42 = scalar_select %p39, %s41, %s25
      %p43 = scmp.ge.s32.totalorder %s42, 2
      %s44 = scalar_select %p43, 0, %s42
      %s45 = ssub.s32 %s25, %s44
      %s46 = ssub.s32 %s26, %s40
      %s47 = sor.u32 %s45, %s46
      %p48 = scmp.eq.s32.totalorder %s47, 0
      %s50 = sadd.s32 %s49, 1
      %s51 = scalar_select %p48, %s49, %s50
      %p54 = pneg %p48
      %p55 = scmp.eq.s32.totalorder %s18, 1
      %p56 = por %p54, %p55
      %p57 = scmp.ne.s32.totalorder %s49, %s52
      %p58 = scmp.eq.s32.totalorder %s18, 0
      %p59 = por %p57, %p58
      %p60 = scmp.ne.s32.totalorder %s49, %s52
      %p61 = scmp.eq.s32.totalorder %s23, 1
      %p62 = por %p60, %p61
      %p63 = scmp.ne.s32.totalorder %s52, %s53
      %p64 = scmp.eq.s32.totalorder %s23, 0
      %p65 = por %p63, %p64
      %p66 = scmp.ne.s32.totalorder %s52, %s53
      %p67 = scmp.eq.s32.totalorder %s24, 1
      %p68 = por %p66, %p67
      %p70 = scmp.ne.s32.totalorder %s53, %s69
      %p71 = scmp.eq.s32.totalorder %s24, 0
      %p72 = por %p70, %p71
      %s73 = ssub.s32 %s25, %s44
      %s74 = ssub.s32 %s27, %s36
      %s75 = sor.u32 %s73, %s74
      %p76 = scmp.eq.s32.totalorder %s75, 0
      %s78 = sadd.s32 %s77, 1
      %s79 = scalar_select %p76, %s77, %s78
      %p82 = pneg %p76
      %p83 = scmp.eq.s32.totalorder %s18, 1
      %p84 = por %p82, %p83
      %p85 = scmp.ne.s32.totalorder %s77, %s80
      %p86 = scmp.eq.s32.totalorder %s18, 0
      %p87 = por %p85, %p86
      %p88 = scmp.ne.s32.totalorder %s77, %s80
      %p89 = scmp.eq.s32.totalorder %s23, 1
      %p90 = por %p88, %p89
      %p91 = scmp.ne.s32.totalorder %s80, %s81
      %p92 = scmp.eq.s32.totalorder %s23, 0
      %p93 = por %p91, %p92
      %p94 = scmp.ne.s32.totalorder %s80, %s81
      %p95 = scmp.eq.s32.totalorder %s24, 1
      %p96 = por %p94, %p95
      %p98 = scmp.ne.s32.totalorder %s81, %s97
      %p99 = scmp.eq.s32.totalorder %s24, 0
      %p100 = por %p98, %p99
      %s101 = ssub.s32 %s25, %s44
      %s102 = ssub.s32 %s27, %s36
      %s103 = sor.u32 %s101, %s102
      %p104 = scmp.eq.s32.totalorder %s103, 0
      %s106 = sadd.s32 %s105, 1
      %s107 = scalar_select %p104, %s105, %s106
      %p110 = pneg %p104
      %p111 = scmp.eq.s32.totalorder %s18, 1
      %p112 = por %p110, %p111
      %p113 = scmp.ne.s32.totalorder %s105, %s108
      %p114 = scmp.eq.s32.totalorder %s18, 0
      %p115 = por %p113, %p114
      %p116 = scmp.ne.s32.totalorder %s105, %s108
      %p117 = scmp.eq.s32.totalorder %s23, 1
      %p118 = por %p116, %p117
      %p119 = scmp.ne.s32.totalorder %s108, %s109
      %p120 = scmp.eq.s32.totalorder %s23, 0
      %p121 = por %p119, %p120
      %p122 = scmp.ne.s32.totalorder %s108, %s109
      %p123 = scmp.eq.s32.totalorder %s24, 1
      %p124 = por %p122, %p123
      %p126 = scmp.ne.s32.totalorder %s109, %s125
      %p127 = scmp.eq.s32.totalorder %s24, 0
      %p128 = por %p126, %p127
      %s129 = ssub.s32 %s25, %s44
      %s130 = ssub.s32 %s26, %s40
      %s131 = sor.u32 %s129, %s130
      %s132 = ssub.s32 %s27, %s36
      %s133 = sor.u32 %s131, %s132
      %p134 = scmp.eq.s32.totalorder %s133, 0
      %s136 = sadd.s32 %s135, 1
      %s137 = scalar_select %p134, %s135, %s136
      %p140 = pneg %p134
      %p141 = scmp.eq.s32.totalorder %s18, 1
      %p142 = por %p140, %p141
      %p143 = scmp.ne.s32.totalorder %s135, %s138
      %p144 = scmp.eq.s32.totalorder %s18, 0
      %p145 = por %p143, %p144
      %p146 = scmp.ne.s32.totalorder %s135, %s138
      %p147 = scmp.eq.s32.totalorder %s23, 1
      %p148 = por %p146, %p147
      %p149 = scmp.ne.s32.totalorder %s138, %s139
      %p150 = scmp.eq.s32.totalorder %s23, 0
      %p151 = por %p149, %p150
      %p152 = scmp.ne.s32.totalorder %s138, %s139
      %p153 = scmp.eq.s32.totalorder %s24, 1
      %p154 = por %p152, %p153
      %p156 = scmp.ne.s32.totalorder %s139, %s155
      %p157 = scmp.eq.s32.totalorder %s24, 0
      %p158 = por %p156, %p157
      %p159 = scmp.le.s32.totalorder 1, %s18
      %p160 = scmp.lt.s32.totalorder %s18, 3
      %p161 = pnand %p159, %p160
      %p162 = pneg %p161
      // Predicated region
      $region9: #{tpu_custom_call.1} parent=5 // pred_check
        _
      $region10: #{tpu_custom_call.1} parent=5 // pred_check_branch
        %164 = sbr.rel (%p161) target = $region12
      $region11: #{tpu_custom_call.1} parent=5 // pred_region
        %s165 = ssub.s32 %s18, 1
      $region12: #{tpu_custom_call.1} parent=5 // pred_fallthru
        _
      %p166 = scmp.lt.s32.totalorder %s18, 2
      // Predicated region
      $region13: #{tpu_custom_call.1} parent=5 // pred_check
        %p167 = pneg %p166
      $region14: #{tpu_custom_call.1} parent=5 // pred_check_branch
        %169 = sbr.rel (%p167) target = $region16
      $region15: #{tpu_custom_call.1} parent=5 // pred_region
        // Predicated region
        $region17: #{tpu_custom_call.1} parent=15 // pred_check
          %p170 = pneg %p59
        $region18: #{tpu_custom_call.1} parent=15 // pred_check_branch
          %172 = sbr.rel (%p170) target = $region20
        $region19: #{tpu_custom_call.1} parent=15 // pred_region
          %s173 = sand.u32 %s49, 1
          %s174 = scalar_lea.sflag [#allocation3], %s173
          %s175 = sand.u32 %s49, 1
          %s176 = smul.addr %s175, 8
          %s177 = scalar_lea.vmem [#allocation2], %s176
          %s179 = ssub.s32 128, 128
          %180 = vsyncadd %s174, %s179
          %s181 = sadd.s32 %s26, %s25
          %s182 = smul.addr %s181, 128
          %s183 = scalar_lea.hbm %s0, %s182
          %s185 = sshll.u32 %s177, 4
          %s186 = int_to_ptr.vmem [resolvable:$true] %s185
          %188 = dma.hbm_to_vmem [thread:$0]  %s183, 128, %s186, %s174
        $region20: #{tpu_custom_call.1} parent=15 // pred_fallthru
          _
        // Predicated region
        $region21: #{tpu_custom_call.1} parent=15 // pred_check
          %p189 = pneg %p87
        $region22: #{tpu_custom_call.1} parent=15 // pred_check_branch
          %191 = sbr.rel (%p189) target = $region24
        $region23: #{tpu_custom_call.1} parent=15 // pred_region
          %s192 = sand.u32 %s77, 1
          %s193 = scalar_lea.sflag [#allocation6], %s192
          %s194 = sand.u32 %s77, 1
          %s195 = smul.addr %s194, 128
          %s196 = scalar_lea.vmem [#allocation5], %s195
          %s198 = ssub.s32 2048, 2048
          %199 = vsyncadd %s193, %s198
          %s200 = smul.addr %s25, 16
          %s201 = sadd.s32 %s27, %s200
          %s202 = smul.addr %s201, 128
          %s203 = scalar_lea.hbm %s1, %s202
          %s204 = sshll.u32 %s196, 4
          %s205 = int_to_ptr.vmem [resolvable:$true] %s204
          %210 = dma.hbm_to_vmem [thread:$0]  %s203, 2048, %s205, %s193, 128, 128, 8
        $region24: #{tpu_custom_call.1} parent=15 // pred_fallthru
          _
        // Predicated region
        $region25: #{tpu_custom_call.1} parent=15 // pred_check
          %p211 = pneg %p115
        $region26: #{tpu_custom_call.1} parent=15 // pred_check_branch
          %213 = sbr.rel (%p211) target = $region28
        $region27: #{tpu_custom_call.1} parent=15 // pred_region
          %p214 = scmp.lt.s32.totalorder %s25, 1
          %s215 = scalar_select %p214, %s25, 1
          %p216 = scmp.lt.s32.totalorder %s27, 0
          %s217 = scalar_select %p216, %s27, 0
          %s218 = sadd.s32 %s217, %s215
          %s219 = scalar_lea.vmem %s2, %s218
        $region28: #{tpu_custom_call.1} parent=15 // pred_fallthru
          _
      $region16: #{tpu_custom_call.1} parent=5 // pred_fallthru
        _
      %p220 = scmp.le.s32.totalorder 1, %s18
      %p221 = scmp.lt.s32.totalorder %s18, 3
      %p222 = pnand %p220, %p221
      %p223 = pneg %p222
      // Predicated region
      $region29: #{tpu_custom_call.1} parent=5 // pred_check
        _
      $region30: #{tpu_custom_call.1} parent=5 // pred_check_branch
        %225 = sbr.rel (%p222) target = $region32
      $region31: #{tpu_custom_call.1} parent=5 // pred_region
        %s226 = ssub.s32 %s18, 1
        %s227 = sand.u32 %s52, 1
        %s228 = scalar_lea.sflag [#allocation3], %s227
        %s229 = sand.u32 %s52, 1
        %s230 = smul.addr %s229, 8
        %s231 = scalar_lea.vmem [#allocation2], %s230
        // Predicated region
        $region33: #{tpu_custom_call.1} parent=31 // pred_check
          %p232 = pneg %p65
        $region34: #{tpu_custom_call.1} parent=31 // pred_check_branch
          %234 = sbr.rel (%p232) target = $region36
        $region35: #{tpu_custom_call.1} parent=31 // pred_region
          %235 = dma.done %s228, 128
        $region36: #{tpu_custom_call.1} parent=31 // pred_fallthru
          _
        %s236 = sand.u32 %s80, 1
        %s237 = scalar_lea.sflag [#allocation6], %s236
        %s238 = sand.u32 %s80, 1
        %s239 = smul.addr %s238, 128
        %s240 = scalar_lea.vmem [#allocation5], %s239
        // Predicated region
        $region37: #{tpu_custom_call.1} parent=31 // pred_check
          %p241 = pneg %p93
        $region38: #{tpu_custom_call.1} parent=31 // pred_check_branch
          %243 = sbr.rel (%p241) target = $region40
        $region39: #{tpu_custom_call.1} parent=31 // pred_region
          %244 = dma.done %s237, 2048
        $region40: #{tpu_custom_call.1} parent=31 // pred_fallthru
          _
        %s245 = sand.u32 %s52, 1
        %s246 = scalar_lea.sflag [#allocation3], %s245
        %s247 = sand.u32 %s52, 1
        %s248 = smul.addr %s247, 8
        %s249 = scalar_lea.vmem [#allocation2], %s248
        %p250 = pneg %p65
        %p251 = pneg %p62
        %s252 = sand.u32 %s80, 1
        %s253 = scalar_lea.sflag [#allocation6], %s252
        %s254 = sand.u32 %s80, 1
        %s255 = smul.addr %s254, 128
        %s256 = scalar_lea.vmem [#allocation5], %s255
        %p257 = pneg %p93
        %p258 = pneg %p90
        %p259 = scmp.lt.s32.totalorder %s28, 1
        %s260 = scalar_select %p259, %s28, 1
        %p261 = scmp.lt.s32.totalorder %s30, 0
        %s262 = scalar_select %p261, %s30, 0
        %s263 = sadd.s32 %s262, %s260
        %s264 = scalar_lea.vmem %s2, %s263
        %p265 = pneg %p121
        %p266 = pneg %p118
        %p267 = pneg %p151
        %p268 = pneg %p148
        %s269 = sand.u32 %s138, 1
        %s270 = scalar_lea.sflag [#allocation4], %s269
        %s271 = sand.u32 %s138, 1
        %s272 = smul.addr %s271, 8
        %s273 = scalar_lea.vmem [#allocation7], %s272
        %p274 = scmp.lt.s32.totalorder %s28, 1
        %s275 = scalar_select %p274, %s28, 1
        %p276 = scmp.lt.s32.totalorder %s30, 0
        %s277 = scalar_select %p276, %s30, 0
        %s278 = sadd.s32 %s277, %s275
        %s279 = scalar_lea.vmem %s2, %s278
        %v280 = vld [vmem:[%s231] sm:$0xff]
        %v281 = vld [vmem:[%s240] sm:$0xff]
        %v282 = vld [vmem:[%s240 + $0x8] sm:$0xff]
        %v283 = vld [vmem:[%s240 + $0x10] sm:$0xff]
        %v284 = vld [vmem:[%s240 + $0x18] sm:$0xff]
        %v285 = vld [vmem:[%s240 + $0x20] sm:$0xff]
        %v286 = vld [vmem:[%s240 + $0x28] sm:$0xff]
        %v287 = vld [vmem:[%s240 + $0x30] sm:$0xff]
        %v288 = vld [vmem:[%s240 + $0x38] sm:$0xff]
        %v289 = vld [vmem:[%s240 + $0x40] sm:$0xff]
        %v290 = vld [vmem:[%s240 + $0x48] sm:$0xff]
        %v291 = vld [vmem:[%s240 + $0x50] sm:$0xff]
        %v292 = vld [vmem:[%s240 + $0x58] sm:$0xff]
        %v293 = vld [vmem:[%s240 + $0x60] sm:$0xff]
        %v294 = vld [vmem:[%s240 + $0x68] sm:$0xff]
        %v295 = vld [vmem:[%s240 + $0x70] sm:$0xff]
        %v296 = vld [vmem:[%s240 + $0x78] sm:$0xff]
        %v297 = vld [vmem:[%s279] sm:$0x1]
        %v299 = vlaneseq
        %v300 = vshrl.u32 %v299, 7
        %v301 = vsub.s32 0, %v300
        %v302 = vrot.slane %v297, %v301
        %304 = vmatprep.subr.mxu0 0.0
        %305 = vmatpush1.msra.mxu0 %v281
        %306 = vmatprep.subr.mxu0 0.0
        %307 = vmatpush1.msra.mxu0 %v282
        %308 = vmatprep.subr.mxu0 0.0
        %309 = vmatpush1.msra.mxu0 %v283
        %310 = vmatprep.subr.mxu0 0.0
        %311 = vmatpush1.msra.mxu0 %v284
        %312 = vmatprep.subr.mxu0 0.0
        %313 = vmatpush1.msra.mxu0 %v285
        %314 = vmatprep.subr.mxu0 0.0
        %315 = vmatpush1.msra.mxu0 %v286
        %316 = vmatprep.subr.mxu0 0.0
        %317 = vmatpush1.msra.mxu0 %v287
        %318 = vmatprep.subr.mxu0 0.0
        %319 = vmatpush1.msra.mxu0 %v288
        %320 = vmatprep.subr.mxu0 0.0
        %321 = vmatpush1.msra.mxu0 %v289
        %322 = vmatprep.subr.mxu0 0.0
        %323 = vmatpush1.msra.mxu0 %v290
        %324 = vmatprep.subr.mxu0 0.0
        %325 = vmatpush1.msra.mxu0 %v291
        %326 = vmatprep.subr.mxu0 0.0
        %327 = vmatpush1.msra.mxu0 %v292
        %328 = vmatprep.subr.mxu0 0.0
        %329 = vmatpush1.msra.mxu0 %v293
        %330 = vmatprep.subr.mxu0 0.0
        %331 = vmatpush1.msra.mxu0 %v294
        %332 = vmatprep.subr.mxu0 0.0
        %333 = vmatpush1.msra.mxu0 %v295
        %334 = vmatprep.subr.mxu0 0.0
        %335 = vmatpush1.msra.mxu0 %v296
        %336 = vmatprep.subr.mxu0 0.0
        %337 = vmatpush1.msra.mxu0 0.0
        %338 = vmatprep.subr.mxu0 0.0
        %339 = vmatpush1.msra.mxu0 0.0
        %340 = vmatprep.subr.mxu0 0.0
        %341 = vmatpush1.msra.mxu0 0.0
        %342 = vmatprep.subr.mxu0 0.0
        %343 = vmatpush1.msra.mxu0 0.0
        %344 = vmatprep.subr.mxu0 0.0
        %345 = vmatpush1.msra.mxu0 0.0
        %346 = vmatprep.subr.mxu0 0.0
        %347 = vmatpush1.msra.mxu0 0.0
        %348 = vmatprep.subr.mxu0 0.0
        %349 = vmatpush1.msra.mxu0 0.0
        %350 = vmatprep.subr.mxu0 0.0
        %351 = vmatpush1.msra.mxu0 0.0
        %352 = vmatprep.subr.mxu0 0.0
        %353 = vmatpush1.msra.mxu0 0.0
        %354 = vmatprep.subr.mxu0 0.0
        %355 = vmatpush1.msra.mxu0 0.0
        %356 = vmatprep.subr.mxu0 0.0
        %357 = vmatpush1.msra.mxu0 0.0
        %358 = vmatprep.subr.mxu0 0.0
        %359 = vmatpush1.msra.mxu0 0.0
        %360 = vmatprep.subr.mxu0 0.0
        %361 = vmatpush1.msra.mxu0 0.0
        %362 = vmatprep.subr.mxu0 0.0
        %363 = vmatpush1.msra.mxu0 0.0
        %364 = vmatprep.subr.mxu0 0.0
        %365 = vmatpush1.msra.mxu0 0.0
        %366 = vmatprep.subr.mxu0 0.0
        %367 = vmatpush1.msra.mxu0 0.0
        %368 = vmatprep.mubr.f32.mxu0 0.0
        %369 = vmatmul.mubr.f32.gmra.mrb[0].mxu0 %v280
        %v370 = vpop.f32.mrb[0].mxu0
        %v371 = vadd.f32 %v302, %v370
        %v372 = vpop.f32.mrb[0].mxu0
        %373 = vdwg.mxu0
        %v374 = vmul.f32 %v371, 0.5
        %v375 = vmul.f32 %v371, 0.70710677
        %v376 = verf.f32.pop %v375
        %v377 = vadd.f32 %v376, 1.0
        %v378 = vmul.f32 %v374, %v377
        %379 = vst [vmem:[%s273] sm:$0xff] %v378
        %s380 = sand.u32 %s138, 1
        %s381 = scalar_lea.sflag [#allocation4], %s380
        %s382 = sand.u32 %s138, 1
        %s383 = smul.addr %s382, 8
        %s384 = scalar_lea.vmem [#allocation7], %s383
        // Predicated region
        $region41: #{tpu_custom_call.1} parent=31 // pred_check
          %p385 = pneg %p148
        $region42: #{tpu_custom_call.1} parent=31 // pred_check_branch
          %387 = sbr.rel (%p385) target = $region44
        $region43: #{tpu_custom_call.1} parent=31 // pred_region
          %s389 = ssub.s32 128, 128
          %390 = vsyncadd %s381, %s389
          %s391 = sadd.s32 %s30, %s29
          %s392 = sadd.s32 %s391, %s28
          %s393 = smul.addr %s392, 128
          %s394 = scalar_lea.hbm %s3, %s393
          %s396 = sshll.u32 %s384, 4
          %s397 = int_to_ptr.vmem [resolvable:$true] %s396
          %399 = dma.vmem_to_hbm [thread:$0]  %s397, 128, %s394, %s381
        $region44: #{tpu_custom_call.1} parent=31 // pred_fallthru
          _
      $region32: #{tpu_custom_call.1} parent=5 // pred_fallthru
        _
      %p400 = scmp.le.s32.totalorder 2, %s18
      // Predicated region
      $region45: #{tpu_custom_call.1} parent=5 // pred_check
        %p401 = pneg %p400
      $region46: #{tpu_custom_call.1} parent=5 // pred_check_branch
        %403 = sbr.rel (%p401) target = $region48
      $region47: #{tpu_custom_call.1} parent=5 // pred_region
        %s404 = ssub.s32 %s18, 2
        // Predicated region
        $region49: #{tpu_custom_call.1} parent=47 // pred_check
          %p405 = pneg %p154
        $region50: #{tpu_custom_call.1} parent=47 // pred_check_branch
          %407 = sbr.rel (%p405) target = $region52
        $region51: #{tpu_custom_call.1} parent=47 // pred_region
          %s408 = sand.u32 %s139, 1
          %s409 = scalar_lea.sflag [#allocation4], %s408
          %s410 = sand.u32 %s139, 1
          %s411 = smul.addr %s410, 8
          %s412 = scalar_lea.vmem [#allocation7], %s411
          %413 = dma.done %s409, 128
        $region52: #{tpu_custom_call.1} parent=47 // pred_fallthru
          _
      $region48: #{tpu_custom_call.1} parent=5 // pred_fallthru
        _
    $region6: #{tpu_custom_call.1} parent=1 // loop_footer
      %s22 = sadd.s32 1, %s18
    $region7: #{tpu_custom_call.1} parent=1 // loop_footer_branch
      %17 = sbr.rel target = $region3
    $region8: #{tpu_custom_call.1} parent=1 // loop_exit
      _
    %414 = vsyncpa [#allocation3], 1
    %s415 = scalar_lea.sflag [#allocation3], 1
    %416 = vsyncpa %s415, 1
    %417 = vsyncpa [#allocation6], 1
    %s418 = scalar_lea.sflag [#allocation6], 1
    %419 = vsyncpa %s418, 1
    %420 = vsyncpa [#allocation4], 1
    %s421 = scalar_lea.sflag [#allocation4], 1
    %422 = vsyncpa %s421, 1

</llo_original>
